<compile_context>
chip_gen: v6e
topology: v6e:2x2x1
jax: 0.10.0
libtpu: 0.0.40
codegen_flags: <defaults>
</compile_context>

<pallas_src>
import functools

import numpy as np
import jax
import jax.numpy as jnp
from jax.experimental import pallas as pl
from jax.experimental.pallas import tpu as pltpu


def _round_up(x, m):
    return ((x + m - 1) // m) * m


# ----------------------------------------------------------------------------
# Kernel 1: batched input projection   U = [x | m] @ [W_in; W_mem] + bias
# (h-independent -> embarrassingly parallel over all T*B rows)
# ----------------------------------------------------------------------------
def input_projection_kernel(xm_ref, w_ref, bias_ref, u_ref):
    u_ref[...] = (
        jnp.dot(xm_ref[...], w_ref[...], preferred_element_type=jnp.float32)
        + bias_ref[...]
    )


def project_inputs(x_seq, m_seq, params, *, row_tile=256):
    """(T,B,in), (T,B,mem) -> (T,B,n) f32 pre-activation contribution (+bias)."""
    T, B, _ = x_seq.shape
    n_units = params["bias_row"].shape[-1]
    w_inmem = params["w_inmem"]                     # (in_size+memory_size, n)
    K = w_inmem.shape[0]

    # Concatenate features once for the whole sequence (fused-K matmul) and
    # cast operands to the matmul dtype (bf16 -> half the DMA bytes).
    xm = jnp.concatenate([x_seq, m_seq], axis=-1).reshape(T * B, K)
    xm = xm.astype(w_inmem.dtype)

    R = T * B
    tile = min(row_tile, _round_up(R, 8))
    Rp = _round_up(R, tile)
    if Rp != R:
        xm = jnp.pad(xm, ((0, Rp - R), (0, 0)))

    u = pl.pallas_call(
        input_projection_kernel,
        out_shape=jax.ShapeDtypeStruct((Rp, n_units), jnp.float32),
        grid_spec=pltpu.PrefetchScalarGridSpec(
            num_scalar_prefetch=0,
            grid=(Rp // tile,),
            in_specs=[
                pl.BlockSpec((tile, K), lambda r: (r, 0)),        # stream rows
                pl.BlockSpec((K, n_units), lambda r: (0, 0)),     # resident
                pl.BlockSpec((1, n_units), lambda r: (0, 0)),     # resident
            ],
            out_specs=pl.BlockSpec((tile, n_units), lambda r: (r, 0)),
        ),
        compiler_params=pltpu.CompilerParams(
            dimension_semantics=("parallel",)),
    )(xm, w_inmem, params["bias_row"])

    return u[:R].reshape(T, B, n_units)


# ----------------------------------------------------------------------------
# Kernel 2: recurrent scan.  Grid over timesteps; weights resident in VMEM,
# h carried in a VMEM scratch accumulator; one fused MXU dot per step.
# ----------------------------------------------------------------------------
def reservoir_recurrent_kernel(u_ref, h0_ref, w_ref, h_out_ref, h_scratch,
                               *, beta, with_residual):
    t = pl.program_id(0)

    @pl.when(t == 0)
    def _init():
        h_scratch[...] = h0_ref[...]

    h = h_scratch[...]                               # (B, n) f32
    n = h.shape[-1]

    # Single MXU call: h @ [W_rec | alpha*O]  (or just h @ W_rec if O == 0).
    hw = jnp.dot(h, w_ref[...], preferred_element_type=jnp.float32)
    if with_residual:
        state_part = hw[:, :n]
        residual_part = hw[:, n:]
    else:
        state_part = hw
        residual_part = None

    # f32 epilogue (bias already folded into u by the projection kernel).
    h_new = beta * jnp.tanh(u_ref[0] + state_part)
    if with_residual:
        h_new = residual_part + h_new                # alpha already folded in

    h_scratch[...] = h_new
    h_out_ref[0] = h_new


def recurrent_scan(u, h0, params):
    T, B, n_units = u.shape
    w_rec_o = params["w_rec_o"]                      # (n, n) or (n, 2n), f32
    h0 = h0.astype(jnp.float32)

    kernel = functools.partial(
        reservoir_recurrent_kernel,
        beta=float(params["beta"]),
        with_residual=params["with_residual"],
    )

    return pl.pallas_call(
        kernel,
        out_shape=jax.ShapeDtypeStruct((T, B, n_units), jnp.float32),
        grid_spec=pltpu.PrefetchScalarGridSpec(
            num_scalar_prefetch=0,
            grid=(T,),
            in_specs=[
                pl.BlockSpec((1, B, n_units), lambda t: (t, 0, 0)),  # U[t]
                pl.BlockSpec((B, n_units), lambda t: (0, 0)),        # h0 (once)
                pl.BlockSpec(w_rec_o.shape, lambda t: (0, 0)),       # resident
            ],
            out_specs=pl.BlockSpec((1, B, n_units), lambda t: (t, 0, 0)),
            scratch_shapes=[pltpu.VMEM((B, n_units), jnp.float32)],  # h carry
        ),
        compiler_params=pltpu.CompilerParams(
            # time axis carries h -> must be sequential ("arbitrary")
            dimension_semantics=("arbitrary",)),
    )(u, h0, w_rec_o)


# ----------------------------------------------------------------------------
# Public forward wrappers
# ----------------------------------------------------------------------------
def reservoir_forward_sequence(x_seq, m_seq, h0, params):
    """Apply the cell over a whole sequence: returns all states (T, B, n)."""
    u = project_inputs(x_seq, m_seq, params)
    return recurrent_scan(u, h0, params)


def reservoir_cell_forward(x, m, h_prev, params):
    """Single-step API matching the PyTorch module's forward(x, m, h_prev)."""
    return reservoir_forward_sequence(x[None], m[None], h_prev, params)[0]


# ----------------------------------------------------------------------------
# Deterministic synthetic parameter initialization (mirrors __init__ shapes).
# ----------------------------------------------------------------------------
def init_params(key, in_size, memory_size, n_units, *, in_scaling,
                memory_scaling, bias_scaling, rho, alpha, beta,
                O=None, matmul_dtype=jnp.bfloat16):
    k_in, k_mem, k_rec, k_bias = jax.random.split(key, 4)

    # sparse_tensor_init(M, N) * scaling -> dense uniform stand-in, same shape.
    in_kernel = (jax.random.uniform(k_in, (in_size, n_units),
                                    minval=-1.0, maxval=1.0) * in_scaling)
    memory_kernel = (jax.random.uniform(k_mem, (memory_size, n_units),
                                        minval=-1.0, maxval=1.0) * memory_scaling)

    # init_recurrent_kernel(M, rho): random matrix rescaled to spectral radius.
    w_rec = np.asarray(jax.random.uniform(k_rec, (n_units, n_units),
                                          minval=-1.0, maxval=1.0))
    spectral_radius = float(np.max(np.abs(np.linalg.eigvals(w_rec))))
    recurrent_kernel = jnp.asarray(w_rec * (rho / spectral_radius), jnp.float32)

    # init_bias(M, bias_scaling)
    bias = (jax.random.uniform(k_bias, (n_units,),
                               minval=-1.0, maxval=1.0) * bias_scaling)

    if O is None:
        O = jnp.zeros((n_units, n_units), jnp.float32)   # module default
    O = jnp.asarray(O, jnp.float32)
    with_residual = bool(np.any(np.asarray(O) != 0.0))

    # ---- kernel-side fused / folded tensors --------------------------------
    # Stack [W_in; W_mem] along K and cast to the matmul dtype (bf16).
    w_inmem = jnp.concatenate([in_kernel, memory_kernel], axis=0).astype(matmul_dtype)
    # Fold alpha into O once; keep W_rec in f32 (spectral-radius sensitive).
    if with_residual:
        w_rec_o = jnp.concatenate([recurrent_kernel, alpha * O], axis=1)
    else:
        w_rec_o = recurrent_kernel          # residual dot elided in-kernel

    return {
        # module-faithful f32 parameters (used by the pure-JAX reference)
        "in_kernel": in_kernel.astype(jnp.float32),
        "memory_kernel": memory_kernel.astype(jnp.float32),
        "recurrent_kernel": recurrent_kernel,
        "O": O,
        "bias": bias.astype(jnp.float32),
        "alpha": float(alpha),
        "beta": float(beta),
        # fused tensors consumed by the Pallas kernels
        "w_inmem": w_inmem,
        "w_rec_o": w_rec_o.astype(jnp.float32),
        "bias_row": bias.reshape(1, n_units).astype(jnp.float32),
        "with_residual": with_residual,
        "matmul_dtype": matmul_dtype,
    }


# ----------------------------------------------------------------------------
# Pure-JAX f32 reference (faithful to the PyTorch module's forward).
# ----------------------------------------------------------------------------
def reference_step(x, m, h_prev, params):
    input_part = x @ params["in_kernel"]
    memory_part = m @ params["memory_kernel"]
    state_part = h_prev @ params["recurrent_kernel"]
    residual_part = h_prev @ params["O"]
    return (params["alpha"] * residual_part
            + params["beta"] * jnp.tanh(state_part + memory_part
                                        + input_part + params["bias"]))


def reference_sequence(x_seq, m_seq, h0, params):
    hs, h = [], h0
    for t in range(x_seq.shape[0]):
        h = reference_step(x_seq[t], m_seq[t], h, params)
        hs.append(h)
    return jnp.stack(hs, axis=0)


if __name__ == "__main__":
    T, B = 8, 8
    in_size, memory_size, n_units = 16, 32, 128

    key = jax.random.PRNGKey(0)
    k_par, k_x, k_m, k_h, k_o = jax.random.split(key, 5)

    x_seq = jax.random.normal(k_x, (T, B, in_size), dtype=jnp.float32)
    m_seq = jax.random.normal(k_m, (T, B, memory_size), dtype=jnp.float32)
    h0 = 0.1 * jax.random.normal(k_h, (B, n_units), dtype=jnp.float32)

    common = dict(in_scaling=1.0, memory_scaling=0.5, bias_scaling=0.1,
                  rho=0.9, alpha=0.5, beta=0.5)

    # bf16 is used only for the input-projection operands (f32 accumulation,
    # f32 recurrent path / epilogue), so the deviation from the pure-f32
    # reference is just bf16 input-rounding -> loosened tolerance.
    tol = dict(rtol=5e-2, atol=5e-2)

    # Case 1: module-default O == 0 (residual matmul statically elided).
    params0 = init_params(k_par, in_size, memory_size, n_units, **common)
    h_seq0 = jax.block_until_ready(
        reservoir_forward_sequence(x_seq, m_seq, h0, params0))
    np.testing.assert_allclose(
        np.asarray(h_seq0),
        np.asarray(reference_sequence(x_seq, m_seq, h0, params0)), **tol)

    # Case 2: non-zero O -> exercises the fused h @ [W_rec | alpha*O] path.
    O_rand = 0.1 * jax.random.uniform(k_o, (n_units, n_units),
                                      minval=-1.0, maxval=1.0)
    params1 = init_params(k_par, in_size, memory_size, n_units,
                          O=O_rand, **common)
    h_seq1 = jax.block_until_ready(
        reservoir_forward_sequence(x_seq, m_seq, h0, params1))
    np.testing.assert_allclose(
        np.asarray(h_seq1),
        np.asarray(reference_sequence(x_seq, m_seq, h0, params1)), **tol)

    # Single-step API (matches the PyTorch module's forward signature).
    h1 = jax.block_until_ready(
        reservoir_cell_forward(x_seq[0], m_seq[0], h0, params1))
    np.testing.assert_allclose(
        np.asarray(h1),
        np.asarray(reference_step(x_seq[0], m_seq[0], h0, params1)), **tol)

    print("KERNEL_OK")
</pallas_src>

<mosaic_0001>
module attributes {stable_mosaic.version = 11 : i64} {
  func.func @input_projection_kernel(%arg0: i32, %arg1: memref<64x48xbf16, #tpu.memory_space<vmem>>, %arg2: memref<48x128xbf16, #tpu.memory_space<vmem>>, %arg3: memref<1x128xf32, #tpu.memory_space<vmem>>, %arg4: memref<64x128xf32, #tpu.memory_space<vmem>>) attributes {dimension_semantics = [#tpu.dimension_semantics<parallel>], iteration_bounds = array<i64: 1>, scalar_prefetch = 0 : i64, scratch_operands = 0 : i64, tpu.core_type = #tpu.core_type<tc>, window_params = [{transform_indices = @transform_0, window_bounds = array<i64: 64, 48>}, {pipeline_mode = #tpu.pipeline_mode<synchronous>, transform_indices = @transform_1, window_bounds = array<i64: 48, 128>}, {pipeline_mode = #tpu.pipeline_mode<synchronous>, transform_indices = @transform_2, window_bounds = array<i64: 1, 128>}, {transform_indices = @transform_3, window_bounds = array<i64: 64, 128>}]} {
    %c0 = arith.constant 0 : index
    %c0_0 = arith.constant 0 : index
    %0 = vector.load %arg1[%c0, %c0_0] : memref<64x48xbf16, #tpu.memory_space<vmem>>, vector<64x48xbf16>
    %c0_1 = arith.constant 0 : index
    %c0_2 = arith.constant 0 : index
    %1 = vector.load %arg2[%c0_1, %c0_2] : memref<48x128xbf16, #tpu.memory_space<vmem>>, vector<48x128xbf16>
    %cst = arith.constant dense<0.000000e+00> : vector<64x128xf32>
    %2 = tpu.matmul %0, %1, %cst {dimension_numbers = #tpu.dot_dimension_numbers<[1], [0], [0], [1], [0, 0, 1, 1], [], []>} : vector<64x48xbf16>, vector<48x128xbf16>, vector<64x128xf32> -> vector<64x128xf32>
    %c0_3 = arith.constant 0 : index
    %c0_4 = arith.constant 0 : index
    %3 = vector.load %arg3[%c0_3, %c0_4] : memref<1x128xf32, #tpu.memory_space<vmem>>, vector<1x128xf32>
    %4 = vector.broadcast %3 : vector<1x128xf32> to vector<64x128xf32>
    %5 = arith.addf %2, %4 : vector<64x128xf32>
    %c0_5 = arith.constant 0 : index
    %c0_6 = arith.constant 0 : index
    %6 = vector.load %arg4[%c0_5, %c0_6] : memref<64x128xf32, #tpu.memory_space<vmem>>, vector<64x128xf32>
    tpu.vector_store %arg4[%c0_5, %c0_6], %5 {strides = array<i32>} : memref<64x128xf32, #tpu.memory_space<vmem>>, vector<64x128xf32>,
    return
  }
  func.func @transform_0(%arg0: i32) -> (i32, i32) {
    %c0_i32 = arith.constant 0 : i32
    %c0_i32_0 = arith.constant 0 : i32
    return %arg0, %c0_i32 : i32, i32
  }
  func.func @transform_1(%arg0: i32) -> (i32, i32) {
    %c0_i32 = arith.constant 0 : i32
    %c0_i32_0 = arith.constant 0 : i32
    %c0_i32_1 = arith.constant 0 : i32
    return %c0_i32, %c0_i32_0 : i32, i32
  }
  func.func @transform_2(%arg0: i32) -> (i32, i32) {
    %c0_i32 = arith.constant 0 : i32
    %c0_i32_0 = arith.constant 0 : i32
    %c0_i32_1 = arith.constant 0 : i32
    return %c0_i32, %c0_i32_0 : i32, i32
  }
  func.func @transform_3(%arg0: i32) -> (i32, i32) {
    %c0_i32 = arith.constant 0 : i32
    %c0_i32_0 = arith.constant 0 : i32
    return %arg0, %c0_i32 : i32, i32
  }
}

</mosaic_0001>

<llo_original>
// kernel: tpu_custom_call.1
$region0: #{tpu_custom_call.1}
  #allocation0 [shape = 'u32[]', space=smem, size = 0x4, offset = 0x4, fixed_abs, tag = 'smem constant byte address 0x4 - core index']
  #allocation1 [shape = 'u32[144,128]{1,0:T(1,128)}', space=vmem, size = 0x12000, scoped, tag = 'internal scratch']
  %s0 = inlined_call_operand.vmem [shape: bf16[64,48], index: 0, kind: input, shape index: {}]
  %s1 = inlined_call_operand.vmem [shape: bf16[48,128], index: 1, kind: input, shape index: {}]
  %s2 = inlined_call_operand.vmem [shape: f32[1,128], index: 2, kind: input, shape index: {}]
  %s3 = inlined_call_operand.hbm [shape: f32[64,128], index: 3, kind: output, shape index: {}]
  %s4 = sld [smem:[#allocation0]]
  $region22: #{tpu_custom_call.1} parent=0
    _
  %s6 = ssub.s32 1, %s4
  %s7 = scalar_select 0, %s6, %s4
  $region1: #{tpu_custom_call.1} parent=0
    #allocation2 [shape = 'u8[32768]{0}', space=vmem, size = 0x8000, scoped, tag = 'output window, operand 0, single buffered']
    #allocation3 [shape = 's32[1]{0}', space=sflag, size = 0x4, scoped, tag = 'scoped memory for tpu_custom_call.1']
    %8 = vsyncpa [#allocation3], 0
    // Predicated region
    $region2: #{tpu_custom_call.1} parent=1 // pred_check
      _
    $region3: #{tpu_custom_call.1} parent=1 // pred_check_branch
      %10 = sbr.rel (0) target = $region5
    $region4: #{tpu_custom_call.1} parent=1 // pred_region
      _
    $region5: #{tpu_custom_call.1} parent=1 // pred_fallthru
      _
    // Predicated region
    $region6: #{tpu_custom_call.1} parent=1 // pred_check
      _
    $region7: #{tpu_custom_call.1} parent=1 // pred_check_branch
      %12 = sbr.rel (0) target = $region9
    $region8: #{tpu_custom_call.1} parent=1 // pred_region
      _
    $region9: #{tpu_custom_call.1} parent=1 // pred_fallthru
      _
    // Predicated region
    $region10: #{tpu_custom_call.1} parent=1 // pred_check
      _
    $region11: #{tpu_custom_call.1} parent=1 // pred_check_branch
      %14 = sbr.rel (0) target = $region13
    $region12: #{tpu_custom_call.1} parent=1 // pred_region
      _
    $region13: #{tpu_custom_call.1} parent=1 // pred_fallthru
      _
    %v16 = vld [vmem:[%s0] sm:$0xf]
    %v17 = vld [vmem:[%s0 + $0x4] sm:$0xf]
    %v18 = vld [vmem:[%s0 + $0x8] sm:$0xf]
    %v19 = vld [vmem:[%s0 + $0xc] sm:$0xf]
    %v20 = vld [vmem:[%s0 + $0x10] sm:$0xf]
    %v21 = vld [vmem:[%s0 + $0x14] sm:$0xf]
    %v22 = vld [vmem:[%s0 + $0x18] sm:$0xf]
    %v23 = vld [vmem:[%s0 + $0x1c] sm:$0xf]
    %v24 = vld [vmem:[%s1] sm:$0xf]
    %v25 = vld [vmem:[%s1 + $0x4] sm:$0xf]
    %v26 = vld [vmem:[%s1 + $0x8] sm:$0xf]
    %v27 = vld [vmem:[%s1 + $0xc] sm:$0xf]
    %v28 = vld [vmem:[%s1 + $0x10] sm:$0xf]
    %v29 = vld [vmem:[%s1 + $0x14] sm:$0xf]
    %v30 = vld [vmem:[%s2] sm:$0x1]
    %v32 = vlaneseq
    %v33 = vshrl.u32 %v32, 7
    %v34 = vsub.s32 0, %v33
    %v35 = vrot.slane %v30, %v34
    %v45 = vunpack.c.l.b16 %v16
    %v46 = vunpack.c.l.b16 %v17
    %v47 = vunpack.c.l.b16 %v18
    %v48 = vunpack.c.l.b16 %v19
    %v49 = vunpack.c.l.b16 %v20
    %v50 = vunpack.c.l.b16 %v21
    %v51 = vunpack.c.l.b16 %v22
    %v52 = vunpack.c.l.b16 %v23
    %v53 = vpack.c.b16 %v46, %v45
    %v54 = vpack.c.b16 %v48, %v47
    %v55 = vpack.c.b16 %v50, %v49
    %v56 = vpack.c.b16 %v52, %v51
    %v63 = vunpack.c.l.b16 %v24
    %v64 = vunpack.c.l.b16 %v25
    %v65 = vunpack.c.l.b16 %v26
    %v66 = vunpack.c.l.b16 %v27
    %v67 = vunpack.c.l.b16 %v28
    %v68 = vunpack.c.l.b16 %v29
    %v69 = vpack.c.b16 %v64, %v63
    %v70 = vpack.c.b16 %v66, %v65
    %v71 = vpack.c.b16 %v68, %v67
    %vm75 = vcmask 392192
    %v77 = vsel %vm75, %v53, 0
    %v80 = vsel %vm75, %v54, 0
    %v83 = vsel %vm75, %v55, 0
    %v86 = vsel %vm75, %v56, 0
    %88 = vmatprep.subr.bf16.mxu0 0
    %89 = vmatpush1.bf16.msra.mxu0 0
    %90 = vmatprep.subr.bf16.mxu0 0
    %91 = vmatpush1.bf16.msra.mxu0 0
    %92 = vmatprep.subr.bf16.mxu0 0
    %93 = vmatpush1.bf16.msra.mxu0 0
    %94 = vmatprep.subr.bf16.mxu0 0
    %95 = vmatpush1.bf16.msra.mxu0 0
    %96 = vmatprep.subr.bf16.mxu0 0
    %97 = vmatpush1.bf16.msra.mxu0 0
    %98 = vmatprep.subr.bf16.mxu0 0
    %99 = vmatpush1.bf16.msra.mxu0 %v71
    %100 = vmatprep.subr.bf16.mxu0 0
    %101 = vmatpush1.bf16.msra.mxu0 %v70
    %102 = vmatprep.subr.bf16.mxu0 0
    %103 = vmatpush1.bf16.msra.mxu0 %v69
    %104 = vmatprep.subr.bf16.mxu0 0
    %105 = vmatpush2.bf16.msra.mxu0 0
    %106 = vmatprep.subr.bf16.mxu0 0
    %107 = vmatpush2.bf16.msra.mxu0 0
    %108 = vmatprep.subr.bf16.mxu0 0
    %109 = vmatpush2.bf16.msra.mxu0 0
    %110 = vmatprep.subr.bf16.mxu0 0
    %111 = vmatpush2.bf16.msra.mxu0 0
    %112 = vmatprep.subr.bf16.mxu0 0
    %113 = vmatpush2.bf16.msra.mxu0 0
    %114 = vmatprep.subr.bf16.mxu0 0
    %115 = vmatpush2.bf16.msra.mxu0 0
    %116 = vmatprep.subr.bf16.mxu0 0
    %117 = vmatpush2.bf16.msra.mxu0 0
    %118 = vmatprep.subr.bf16.mxu0 0
    %119 = vmatpush2.bf16.msra.mxu0 0
    %120 = vmatprep.mubr.bf16.mxu0 0
    %121 = vmatmul.mubr.bf16.gmra.mxu0 %v77
    %v122 = vpop.f32.mrf.mxu0
    %v123 = vadd.f32 %v35, %v122
    %v124 = vpop.f32.mrf.mxu0
    %v125 = vpop.f32.mrf.mxu0
    %v126 = vadd.f32 %v35, %v125
    %v127 = vpop.f32.mrf.mxu0
    %128 = vmatprep.mubr.bf16.mxu0 0
    %129 = vmatmul.mubr.bf16.gmra.mxu0 %v80
    %v130 = vpop.f32.mrf.mxu0
    %v131 = vadd.f32 %v35, %v130
    %v132 = vpop.f32.mrf.mxu0
    %v133 = vpop.f32.mrf.mxu0
    %v134 = vadd.f32 %v35, %v133
    %v135 = vpop.f32.mrf.mxu0
    %136 = vmatprep.mubr.bf16.mxu0 0
    %137 = vmatmul.mubr.bf16.gmra.mxu0 %v83
    %v138 = vpop.f32.mrf.mxu0
    %v139 = vadd.f32 %v35, %v138
    %v140 = vpop.f32.mrf.mxu0
    %v141 = vpop.f32.mrf.mxu0
    %v142 = vadd.f32 %v35, %v141
    %v143 = vpop.f32.mrf.mxu0
    %144 = vmatprep.mubr.bf16.mxu0 0
    %145 = vmatmul.mubr.bf16.gmra.mxu0 %v86
    %v146 = vpop.f32.mrf.mxu0
    %v147 = vadd.f32 %v35, %v146
    %v148 = vpop.f32.mrf.mxu0
    %v149 = vpop.f32.mrf.mxu0
    %v150 = vadd.f32 %v35, %v149
    %v151 = vpop.f32.mrf.mxu0
    %152 = vdwg.mxu0
    %153 = vst [vmem:[#allocation2] sm:$0xff] %v123
    %154 = vst [vmem:[#allocation2 + $0x8] sm:$0xff] %v126
    %155 = vst [vmem:[#allocation2 + $0x10] sm:$0xff] %v131
    %156 = vst [vmem:[#allocation2 + $0x18] sm:$0xff] %v134
    %157 = vst [vmem:[#allocation2 + $0x20] sm:$0xff] %v139
    %158 = vst [vmem:[#allocation2 + $0x28] sm:$0xff] %v142
    %159 = vst [vmem:[#allocation2 + $0x30] sm:$0xff] %v147
    %160 = vst [vmem:[#allocation2 + $0x38] sm:$0xff] %v150
    // Predicated region
    $region14: #{tpu_custom_call.1} parent=1 // pred_check
      _
    $region15: #{tpu_custom_call.1} parent=1 // pred_check_branch
      %162 = sbr.rel (0) target = $region17
    $region16: #{tpu_custom_call.1} parent=1 // pred_region
      %s164 = ssub.s32 1024, 1024
      %165 = vsyncadd [#allocation3], %s164
      %s166 = sshll.u32 [#allocation2], 4
      %s167 = int_to_ptr.vmem [resolvable:$true] %s166
      %172 = dma.vmem_to_hbm [thread:$0]  %s167, 1024, %s3, [#allocation3], 128, 128, 8
    $region17: #{tpu_custom_call.1} parent=1 // pred_fallthru
      _
    // Predicated region
    $region18: #{tpu_custom_call.1} parent=1 // pred_check
      _
    $region19: #{tpu_custom_call.1} parent=1 // pred_check_branch
      %174 = sbr.rel (0) target = $region21
    $region20: #{tpu_custom_call.1} parent=1 // pred_region
      %175 = dma.done [#allocation3], 1024
    $region21: #{tpu_custom_call.1} parent=1 // pred_fallthru
      _
    %176 = vsyncpa [#allocation3], 1

</llo_original>
